<compile_context>
chip_gen: v6e
topology: v6e:2x2x1
jax: 0.10.0
libtpu: 0.0.40
codegen_flags: <defaults>
</compile_context>

<pallas_src>
import functools

import jax
import jax.numpy as jnp
from jax.experimental import pallas as pl
from jax.experimental.pallas import tpu as pltpu

_VMEM_BUDGET_BYTES = 36 * 1024 * 1024   # tile-cap budget (fits v7x 64 MiB physical VMEM)
_VMEM_LIMIT_BYTES = 48 * 1024 * 1024    # scoped VMEM limit requested from Mosaic


def _round_up(a, m):
    return ((a + m - 1) // m) * m


def _cdiv(a, b):
    return -(-a // b)


def _vmem_bytes(in_dim, hid_pad, out_pad, n_hidden, tile_b, w_itemsize):
    """Rough per-tile VMEM estimate (activations dominate)."""
    f32 = 4
    act = 3 * hid_pad * tile_b * f32                                  # live h copies
    io = 2 * in_dim * tile_b * f32 + 2 * out_pad * tile_b * f32       # double-buffered x / out
    w = (hid_pad * in_dim + max(0, n_hidden - 1) * hid_pad * hid_pad
         + out_pad * hid_pad) * w_itemsize
    b = (n_hidden * hid_pad + out_pad) * f32
    return act + io + w + b


# --------------------------------------------------------------------------- kernel
def _pinn_kernel(n_hidden, in_dim, x_ref, w0_ref, *rest):
    """Transposed (feature-major) MLP forward for one batch tile.

    x_ref:  (in_dim, tile_b)                 f32  -- x^T block (lane axis = batch)
    w0_ref: (hid_pad, in_dim)                f32/cdt -- first-layer W^T
    wr_ref: (n_hidden-1, hid_pad, hid_pad)   cdt  (only if n_hidden > 1)
    wl_ref: (out_pad, hid_pad)               cdt  -- final-layer W^T (padded to 8 rows)
    bh_ref: (n_hidden, hid_pad, 1)           f32  -- hidden biases as columns
    bl_ref: (out_pad, 1)                     f32  -- final bias as a column
    o_ref:  (out_pad, tile_b)                f32  -- u^T block (all out_pad rows stored)
    """
    if n_hidden > 1:
        wr_ref, wl_ref, bh_ref, bl_ref, o_ref = rest
    else:
        wl_ref, bh_ref, bl_ref, o_ref = rest
        wr_ref = None

    cdt = wl_ref.dtype  # MXU operand dtype (f32 or bf16); accumulation is always f32
    x = x_ref[...]      # (in_dim, tile_b) f32

    # ---- layer 0 ----
    if in_dim < 8:
        # Tiny contraction dim: pure VPU broadcast multiply-add (no MXU, exact f32).
        w0 = w0_ref[...].astype(jnp.float32)            # (hid_pad, in_dim)
        h = w0[:, 0:1] * x[0:1, :]                      # (hid_pad, tile_b)
        for k in range(1, in_dim):
            h = h + w0[:, k:k + 1] * x[k:k + 1, :]
    else:
        h = jnp.dot(w0_ref[...], x.astype(cdt), preferred_element_type=jnp.float32)
    h = h + bh_ref[0]                                   # (hid_pad, 1) lane-broadcast
    h = jnp.tanh(h)                                     # EUP, f32

    # ---- middle hidden layers (trace-time unrolled) ----
    for i in range(1, n_hidden):
        h = jnp.dot(wr_ref[i - 1], h.astype(cdt), preferred_element_type=jnp.float32)
        h = h + bh_ref[i]
        h = jnp.tanh(h)

    # ---- final linear (no tanh): (out_pad, hid_pad) @ (hid_pad, tile_b) ----
    out = jnp.dot(wl_ref[...], h.astype(cdt), preferred_element_type=jnp.float32)
    out = out + bl_ref[...]
    o_ref[...] = out.astype(o_ref.dtype)                # unmasked, lane-dense store


# ------------------------------------------------------------------- param handling
def prepare_pinn_params(weights, biases, compute_dtype=jnp.float32):
    """One-time padding / stacking / casting of parameters (hoisted out of forward).

    weights: list of (in_i, out_i) f32 arrays (x @ W convention, i.e. torch W^T)
    biases:  list of (out_i,) f32 arrays
    compute_dtype: dtype of the MXU matmul operands.  bf16 is MXU-native on v5e, v6e
      and v7x (bias add / tanh / accumulation always stay f32); default f32 is the
      safest for PINN higher-order derivatives.
    """
    n_lin = len(weights)
    assert n_lin >= 2, "need at least one hidden (tanh) layer and a final linear"
    n_hidden = n_lin - 1
    in_dim = weights[0].shape[0]
    out_dim = weights[-1].shape[1]
    hidden_widths = [w.shape[1] for w in weights[:-1]]

    hid_pad = _round_up(max(hidden_widths), 32)   # e.g. width 20 -> 32 (not 128)
    out_pad = max(8, _round_up(out_dim, 8))       # final layer padded to one sublane tile

    # First-layer W^T -> (hid_pad, in_dim).  Kept f32 when the broadcast path is used.
    w0T = (jnp.zeros((hid_pad, in_dim), jnp.float32)
           .at[:hidden_widths[0], :].set(weights[0].T))
    if in_dim >= 8:
        w0T = w0T.astype(compute_dtype)

    # Middle hidden layers W^T stacked -> (n_hidden-1, hid_pad, hid_pad).
    if n_hidden > 1:
        wrT = jnp.zeros((n_hidden - 1, hid_pad, hid_pad), jnp.float32)
        for i in range(1, n_hidden):
            w = weights[i]  # (in_i, out_i)
            wrT = wrT.at[i - 1, :w.shape[1], :w.shape[0]].set(w.T)
        wrT = wrT.astype(compute_dtype)
    else:
        wrT = None

    # Final layer W^T -> (out_pad, hid_pad).
    wl = weights[-1]  # (hid, out_dim)
    wlT = (jnp.zeros((out_pad, hid_pad), jnp.float32)
           .at[:out_dim, :wl.shape[0]].set(wl.T).astype(compute_dtype))

    # Hidden biases stacked as columns; final bias separate.  All f32.
    bh = jnp.zeros((n_hidden, hid_pad, 1), jnp.float32)
    for i in range(n_hidden):
        bh = bh.at[i, :biases[i].shape[0], 0].set(biases[i])
    bl = jnp.zeros((out_pad, 1), jnp.float32).at[:out_dim, 0].set(biases[-1])

    return dict(n_hidden=n_hidden, in_dim=in_dim, out_dim=out_dim,
                hid_pad=hid_pad, out_pad=out_pad,
                w_itemsize=jnp.dtype(compute_dtype).itemsize,
                w0T=w0T, wrT=wrT, wlT=wlT, bh=bh, bl=bl)


def prepare_pinn_input(x, params, *, tile_b=8192):
    """Pad/transpose x once (cacheable: PINN training reuses the same collocation set).

    x: (B, in_dim) f32.  tile_b is the requested batch-tile width in lanes (sweepable;
    ~8192 is safe on all generations, v5e/v6e can go larger).
    """
    in_dim = params["in_dim"]
    assert x.ndim == 2 and x.shape[1] == in_dim
    B = x.shape[0]

    lanes = max(_round_up(B, 128), 128)
    m = lanes // 128                                   # 128-lane groups in the batch
    k = max(1, min(tile_b, lanes) // 128)              # requested groups per tile
    # VMEM-aware cap (v7x: 64 MiB physical VMEM).
    while k > 1 and _vmem_bytes(in_dim, params["hid_pad"], params["out_pad"],
                                params["n_hidden"], 128 * k,
                                params["w_itemsize"]) > _VMEM_BUDGET_BYTES:
        k = max(1, k // 2)
    n_tiles = _cdiv(m, k)
    if m >= 2 and n_tiles % 2 == 1:                    # even split across v7x's 2 TCs
        n_tiles += 1
    k = _cdiv(m, n_tiles)
    tile_b = 128 * k
    B_pad = tile_b * n_tiles

    # x^T, zero-padded only along the batch (lane) axis -> (in_dim, B_pad).
    xT = jnp.zeros((in_dim, B_pad), jnp.float32).at[:, :B].set(x.T)
    return dict(xT=xT, B=B, B_pad=B_pad, tile_b=tile_b, n_tiles=n_tiles)


# ------------------------------------------------------------------------- forward
def pinn_forward_prepared(xin, params):
    """Forward pass using a pre-padded input (see prepare_pinn_input)."""
    n_hidden = params["n_hidden"]
    in_dim = params["in_dim"]
    hid_pad = params["hid_pad"]
    out_pad = params["out_pad"]
    out_dim = params["out_dim"]
    tile_b, n_tiles, B_pad, B = xin["tile_b"], xin["n_tiles"], xin["B_pad"], xin["B"]

    operands = [xin["xT"], params["w0T"]]
    in_specs = [
        pl.BlockSpec((in_dim, tile_b), lambda j: (0, j)),
        pl.BlockSpec((hid_pad, in_dim), lambda j: (0, 0)),
    ]
    if n_hidden > 1:
        operands.append(params["wrT"])
        in_specs.append(
            pl.BlockSpec((n_hidden - 1, hid_pad, hid_pad), lambda j: (0, 0, 0)))
    operands += [params["wlT"], params["bh"], params["bl"]]
    in_specs += [
        pl.BlockSpec((out_pad, hid_pad), lambda j: (0, 0)),
        pl.BlockSpec((n_hidden, hid_pad, 1), lambda j: (0, 0, 0)),
        pl.BlockSpec((out_pad, 1), lambda j: (0, 0)),
    ]
    out_spec = pl.BlockSpec((out_pad, tile_b), lambda j: (0, j))

    outT = pl.pallas_call(
        functools.partial(_pinn_kernel, n_hidden, in_dim),
        out_shape=jax.ShapeDtypeStruct((out_pad, B_pad), jnp.float32),
        grid_spec=pltpu.PrefetchScalarGridSpec(
            num_scalar_prefetch=0,
            grid=(n_tiles,),
            in_specs=in_specs,
            out_specs=out_spec,
        ),
        compiler_params=pltpu.CompilerParams(
            dimension_semantics=("parallel",),
            vmem_limit_bytes=_VMEM_LIMIT_BYTES,
        ),
    )(*operands)

    return outT[:out_dim, :B].T  # (B, out_dim)


def pinn_forward(x, params, *, tile_b=8192):
    """Convenience wrapper: x (B, in_dim) f32 -> (B, out_dim) f32.
    For training loops, call prepare_pinn_input once and reuse it instead."""
    return pinn_forward_prepared(prepare_pinn_input(x, params, tile_b=tile_b), params)


# -------------------------------------------------------------------------- helpers
def init_pinn_params(layers, key):
    """Deterministic init matching torch.nn.Linear default (U(-1/sqrt(fan_in), ...))."""
    weights, biases = [], []
    for i in range(len(layers) - 1):
        fan_in, fan_out = layers[i], layers[i + 1]
        key, kw, kb = jax.random.split(key, 3)
        bound = 1.0 / float(jnp.sqrt(jnp.float32(fan_in)))
        w_torch = jax.random.uniform(
            kw, (fan_out, fan_in), jnp.float32, minval=-bound, maxval=bound
        )  # torch layout (out, in)
        b = jax.random.uniform(
            kb, (fan_out,), jnp.float32, minval=-bound, maxval=bound
        )
        weights.append(w_torch.T)  # (in, out) for the x @ W convention
        biases.append(b)
    return weights, biases


def pinn_reference(x, weights, biases):
    """Pure-JAX reference of the same forward (high-precision matmuls)."""
    h = x
    n_lin = len(weights)
    for i in range(n_lin):
        h = jnp.dot(h, weights[i], precision=jax.lax.Precision.HIGHEST) + biases[i]
        if i < n_lin - 1:
            h = jnp.tanh(h)
    return h


if __name__ == "__main__":
    # layers = [2, 20, 20, 1]: input (x, t), two tanh hidden layers of 20, scalar u.
    layers = [2, 20, 20, 1]
    batch = 8

    key = jax.random.PRNGKey(0)
    key, kx = jax.random.split(key)
    x = jax.random.normal(kx, (batch, layers[0]), jnp.float32)

    weights, biases = init_pinn_params(layers, key)
    u_ref = pinn_reference(x, weights, biases)

    # Default f32 path (safest for PINN higher-order derivatives).
    params_f32 = prepare_pinn_params(weights, biases, compute_dtype=jnp.float32)
    xin = prepare_pinn_input(x, params_f32, tile_b=8192)   # cacheable across train steps
    u = jax.block_until_ready(pinn_forward_prepared(xin, params_f32))
    assert u.shape == (batch, layers[-1])
    assert jnp.allclose(u, u_ref, atol=1e-4, rtol=1e-4)

    # bf16 MXU-operand path (MXU-native on v5e/v6e/v7x); bias/tanh/accum stay f32.
    params_bf16 = prepare_pinn_params(weights, biases, compute_dtype=jnp.bfloat16)
    u_bf16 = jax.block_until_ready(pinn_forward_prepared(xin, params_bf16))
    assert u_bf16.shape == (batch, layers[-1])
    assert jnp.allclose(u_bf16, u_ref, atol=5e-2, rtol=5e-2)

    print("KERNEL_OK")
</pallas_src>

<mosaic_0001>
module attributes {stable_mosaic.version = 11 : i64} {
  func.func @_pinn_kernel(%arg0: i32, %arg1: memref<2x128xf32, #tpu.memory_space<vmem>>, %arg2: memref<32x2xf32, #tpu.memory_space<vmem>>, %arg3: memref<1x32x32xf32, #tpu.memory_space<vmem>>, %arg4: memref<8x32xf32, #tpu.memory_space<vmem>>, %arg5: memref<2x32x1xf32, #tpu.memory_space<vmem>>, %arg6: memref<8x1xf32, #tpu.memory_space<vmem>>, %arg7: memref<8x128xf32, #tpu.memory_space<vmem>>) attributes {dimension_semantics = [#tpu.dimension_semantics<parallel>], iteration_bounds = array<i64: 1>, scalar_prefetch = 0 : i64, scratch_operands = 0 : i64, tpu.core_type = #tpu.core_type<tc>, window_params = [{transform_indices = @transform_0, window_bounds = array<i64: 2, 128>}, {pipeline_mode = #tpu.pipeline_mode<synchronous>, transform_indices = @transform_1, window_bounds = array<i64: 32, 2>}, {pipeline_mode = #tpu.pipeline_mode<synchronous>, transform_indices = @transform_2, window_bounds = array<i64: 1, 32, 32>}, {pipeline_mode = #tpu.pipeline_mode<synchronous>, transform_indices = @transform_3, window_bounds = array<i64: 8, 32>}, {pipeline_mode = #tpu.pipeline_mode<synchronous>, transform_indices = @transform_4, window_bounds = array<i64: 2, 32, 1>}, {pipeline_mode = #tpu.pipeline_mode<synchronous>, transform_indices = @transform_5, window_bounds = array<i64: 8, 1>}, {transform_indices = @transform_6, window_bounds = array<i64: 8, 128>}]} {
    %c0 = arith.constant 0 : index
    %c0_0 = arith.constant 0 : index
    %0 = vector.load %arg1[%c0, %c0_0] : memref<2x128xf32, #tpu.memory_space<vmem>>, vector<2x128xf32>
    %c0_1 = arith.constant 0 : index
    %c0_2 = arith.constant 0 : index
    %1 = vector.load %arg2[%c0_1, %c0_2] : memref<32x2xf32, #tpu.memory_space<vmem>>, vector<32x2xf32>
    %2 = vector.extract_strided_slice %1 {offsets = [0, 0], sizes = [32, 1], strides = [1, 1]} : vector<32x2xf32> to vector<32x1xf32>
    %3 = vector.extract_strided_slice %0 {offsets = [0, 0], sizes = [1, 128], strides = [1, 1]} : vector<2x128xf32> to vector<1x128xf32>
    %4 = vector.broadcast %2 : vector<32x1xf32> to vector<32x128xf32>
    %5 = vector.broadcast %3 : vector<1x128xf32> to vector<32x128xf32>
    %6 = arith.mulf %4, %5 : vector<32x128xf32>
    %7 = vector.extract_strided_slice %1 {offsets = [0, 1], sizes = [32, 1], strides = [1, 1]} : vector<32x2xf32> to vector<32x1xf32>
    %8 = vector.extract_strided_slice %0 {offsets = [1, 0], sizes = [1, 128], strides = [1, 1]} : vector<2x128xf32> to vector<1x128xf32>
    %9 = vector.broadcast %7 : vector<32x1xf32> to vector<32x128xf32>
    %10 = vector.broadcast %8 : vector<1x128xf32> to vector<32x128xf32>
    %11 = arith.mulf %9, %10 : vector<32x128xf32>
    %12 = arith.addf %6, %11 : vector<32x128xf32>
    %c0_3 = arith.constant 0 : index
    %c0_4 = arith.constant 0 : index
    %c0_5 = arith.constant 0 : index
    %13 = vector.load %arg5[%c0_3, %c0_4, %c0_5] : memref<2x32x1xf32, #tpu.memory_space<vmem>>, vector<1x32x1xf32>
    %14 = vector.shape_cast %13 : vector<1x32x1xf32> to vector<32x1xf32>
    %15 = vector.broadcast %14 : vector<32x1xf32> to vector<32x128xf32>
    %16 = arith.addf %12, %15 : vector<32x128xf32>
    %17 = math.tanh %16 : vector<32x128xf32>
    %c0_6 = arith.constant 0 : index
    %c0_7 = arith.constant 0 : index
    %c0_8 = arith.constant 0 : index
    %18 = vector.load %arg3[%c0_6, %c0_7, %c0_8] : memref<1x32x32xf32, #tpu.memory_space<vmem>>, vector<1x32x32xf32>
    %19 = vector.shape_cast %18 : vector<1x32x32xf32> to vector<32x32xf32>
    %cst = arith.constant dense<0.000000e+00> : vector<32x128xf32>
    %20 = tpu.matmul %19, %17, %cst {dimension_numbers = #tpu.dot_dimension_numbers<[1], [0], [0], [1], [0, 0, 1, 1], [], []>} : vector<32x32xf32>, vector<32x128xf32>, vector<32x128xf32> -> vector<32x128xf32>
    %c1 = arith.constant 1 : index
    %c0_9 = arith.constant 0 : index
    %c0_10 = arith.constant 0 : index
    %21 = vector.load %arg5[%c1, %c0_9, %c0_10] : memref<2x32x1xf32, #tpu.memory_space<vmem>>, vector<1x32x1xf32>
    %22 = vector.shape_cast %21 : vector<1x32x1xf32> to vector<32x1xf32>
    %23 = vector.broadcast %22 : vector<32x1xf32> to vector<32x128xf32>
    %24 = arith.addf %20, %23 : vector<32x128xf32>
    %25 = math.tanh %24 : vector<32x128xf32>
    %c0_11 = arith.constant 0 : index
    %c0_12 = arith.constant 0 : index
    %26 = vector.load %arg4[%c0_11, %c0_12] : memref<8x32xf32, #tpu.memory_space<vmem>>, vector<8x32xf32>
    %cst_13 = arith.constant dense<0.000000e+00> : vector<8x128xf32>
    %27 = tpu.matmul %26, %25, %cst_13 {dimension_numbers = #tpu.dot_dimension_numbers<[1], [0], [0], [1], [0, 0, 1, 1], [], []>} : vector<8x32xf32>, vector<32x128xf32>, vector<8x128xf32> -> vector<8x128xf32>
    %c0_14 = arith.constant 0 : index
    %c0_15 = arith.constant 0 : index
    %28 = vector.load %arg6[%c0_14, %c0_15] : memref<8x1xf32, #tpu.memory_space<vmem>>, vector<8x1xf32>
    %29 = vector.broadcast %28 : vector<8x1xf32> to vector<8x128xf32>
    %30 = arith.addf %27, %29 : vector<8x128xf32>
    %c0_16 = arith.constant 0 : index
    %c0_17 = arith.constant 0 : index
    %31 = vector.load %arg7[%c0_16, %c0_17] : memref<8x128xf32, #tpu.memory_space<vmem>>, vector<8x128xf32>
    tpu.vector_store %arg7[%c0_16, %c0_17], %30 {strides = array<i32>} : memref<8x128xf32, #tpu.memory_space<vmem>>, vector<8x128xf32>,
    return
  }
  func.func @transform_0(%arg0: i32) -> (i32, i32) {
    %c0_i32 = arith.constant 0 : i32
    %c0_i32_0 = arith.constant 0 : i32
    return %c0_i32, %arg0 : i32, i32
  }
  func.func @transform_1(%arg0: i32) -> (i32, i32) {
    %c0_i32 = arith.constant 0 : i32
    %c0_i32_0 = arith.constant 0 : i32
    %c0_i32_1 = arith.constant 0 : i32
    return %c0_i32, %c0_i32_0 : i32, i32
  }
  func.func @transform_2(%arg0: i32) -> (i32, i32, i32) {
    %c0_i32 = arith.constant 0 : i32
    %c0_i32_0 = arith.constant 0 : i32
    %c0_i32_1 = arith.constant 0 : i32
    %c0_i32_2 = arith.constant 0 : i32
    return %c0_i32, %c0_i32_0, %c0_i32_1 : i32, i32, i32
  }
  func.func @transform_3(%arg0: i32) -> (i32, i32) {
    %c0_i32 = arith.constant 0 : i32
    %c0_i32_0 = arith.constant 0 : i32
    %c0_i32_1 = arith.constant 0 : i32
    return %c0_i32, %c0_i32_0 : i32, i32
  }
  func.func @transform_4(%arg0: i32) -> (i32, i32, i32) {
    %c0_i32 = arith.constant 0 : i32
    %c0_i32_0 = arith.constant 0 : i32
    %c0_i32_1 = arith.constant 0 : i32
    %c0_i32_2 = arith.constant 0 : i32
    return %c0_i32, %c0_i32_0, %c0_i32_1 : i32, i32, i32
  }
  func.func @transform_5(%arg0: i32) -> (i32, i32) {
    %c0_i32 = arith.constant 0 : i32
    %c0_i32_0 = arith.constant 0 : i32
    %c0_i32_1 = arith.constant 0 : i32
    return %c0_i32, %c0_i32_0 : i32, i32
  }
  func.func @transform_6(%arg0: i32) -> (i32, i32) {
    %c0_i32 = arith.constant 0 : i32
    %c0_i32_0 = arith.constant 0 : i32
    return %c0_i32, %arg0 : i32, i32
  }
}

</mosaic_0001>

<llo_original>
// kernel: tpu_custom_call.1
$region0: #{tpu_custom_call.1}
  #allocation0 [shape = 'u32[]', space=smem, size = 0x4, offset = 0x4, fixed_abs, tag = 'smem constant byte address 0x4 - core index']
  #allocation1 [shape = 'u32[144,128]{1,0:T(1,128)}', space=vmem, size = 0x12000, scoped, tag = 'internal scratch']
  %s0 = inlined_call_operand.vmem [shape: f32[2,128], index: 0, kind: input, shape index: {}]
  %s1 = inlined_call_operand.vmem [shape: f32[32,2], index: 1, kind: input, shape index: {}]
  %s2 = inlined_call_operand.vmem [shape: f32[1,32,32], index: 2, kind: input, shape index: {}]
  %s3 = inlined_call_operand.vmem [shape: f32[8,32], index: 3, kind: input, shape index: {}]
  %s4 = inlined_call_operand.vmem [shape: f32[2,32,1], index: 4, kind: input, shape index: {}]
  %s5 = inlined_call_operand.vmem [shape: f32[8,1], index: 5, kind: input, shape index: {}]
  %s6 = inlined_call_operand.hbm [shape: f32[8,128], index: 6, kind: output, shape index: {}]
  %s7 = sld [smem:[#allocation0]]
  $region34: #{tpu_custom_call.1} parent=0
    _
  %s9 = ssub.s32 1, %s7
  %s10 = scalar_select 0, %s9, %s7
  $region1: #{tpu_custom_call.1} parent=0
    #allocation2 [shape = 'u8[4096]{0}', space=vmem, size = 0x1000, scoped, tag = 'output window, operand 0, single buffered']
    #allocation3 [shape = 's32[1]{0}', space=sflag, size = 0x4, scoped, tag = 'scoped memory for tpu_custom_call.1']
    %11 = vsyncpa [#allocation3], 0
    // Predicated region
    $region2: #{tpu_custom_call.1} parent=1 // pred_check
      _
    $region3: #{tpu_custom_call.1} parent=1 // pred_check_branch
      %13 = sbr.rel (0) target = $region5
    $region4: #{tpu_custom_call.1} parent=1 // pred_region
      _
    $region5: #{tpu_custom_call.1} parent=1 // pred_fallthru
      _
    // Predicated region
    $region6: #{tpu_custom_call.1} parent=1 // pred_check
      _
    $region7: #{tpu_custom_call.1} parent=1 // pred_check_branch
      %15 = sbr.rel (0) target = $region9
    $region8: #{tpu_custom_call.1} parent=1 // pred_region
      _
    $region9: #{tpu_custom_call.1} parent=1 // pred_fallthru
      _
    // Predicated region
    $region10: #{tpu_custom_call.1} parent=1 // pred_check
      _
    $region11: #{tpu_custom_call.1} parent=1 // pred_check_branch
      %17 = sbr.rel (0) target = $region13
    $region12: #{tpu_custom_call.1} parent=1 // pred_region
      _
    $region13: #{tpu_custom_call.1} parent=1 // pred_fallthru
      _
    // Predicated region
    $region14: #{tpu_custom_call.1} parent=1 // pred_check
      _
    $region15: #{tpu_custom_call.1} parent=1 // pred_check_branch
      %19 = sbr.rel (0) target = $region17
    $region16: #{tpu_custom_call.1} parent=1 // pred_region
      _
    $region17: #{tpu_custom_call.1} parent=1 // pred_fallthru
      _
    // Predicated region
    $region18: #{tpu_custom_call.1} parent=1 // pred_check
      _
    $region19: #{tpu_custom_call.1} parent=1 // pred_check_branch
      %21 = sbr.rel (0) target = $region21
    $region20: #{tpu_custom_call.1} parent=1 // pred_region
      _
    $region21: #{tpu_custom_call.1} parent=1 // pred_fallthru
      _
    // Predicated region
    $region22: #{tpu_custom_call.1} parent=1 // pred_check
      _
    $region23: #{tpu_custom_call.1} parent=1 // pred_check_branch
      %23 = sbr.rel (0) target = $region25
    $region24: #{tpu_custom_call.1} parent=1 // pred_region
      _
    $region25: #{tpu_custom_call.1} parent=1 // pred_fallthru
      _
    %v24 = vld [vmem:[%s0] sm:$0x3]
    %v25 = vld [vmem:[%s1] sm:$0xff]
    %v26 = vld [vmem:[%s1 + $0x8] sm:$0xff]
    %v27 = vld [vmem:[%s1 + $0x10] sm:$0xff]
    %v28 = vld [vmem:[%s1 + $0x18] sm:$0xff]
    %30 = vset.pattern.permute.xlu0 0
    %31 = vperm.xlu0 %30, %v25
    %v32 = vpop.permute.xlu0 %31
    %35 = vset.pattern.permute.xlu0 0
    %36 = vperm.xlu0 %35, %v26
    %v37 = vpop.permute.xlu0 %36
    %40 = vset.pattern.permute.xlu0 0
    %41 = vperm.xlu0 %40, %v27
    %v42 = vpop.permute.xlu0 %41
    %45 = vset.pattern.permute.xlu0 0
    %46 = vperm.xlu0 %45, %v28
    %v47 = vpop.permute.xlu0 %46
    %v49 = vlaneseq
    %v50 = vshrl.u32 %v49, 7
    %v51 = vsub.s32 0, %v50
    %v52 = vrot.slane %v24, %v51
    %v53 = vmul.f32 %v32, %v52
    %v54 = vmul.f32 %v37, %v52
    %v55 = vmul.f32 %v42, %v52
    %v56 = vmul.f32 %v47, %v52
    %57 = vset.pattern.permute.xlu0 1
    %58 = vperm.xlu0 %57, %v25
    %v59 = vpop.permute.xlu0 %58
    %61 = vset.pattern.permute.xlu0 1
    %62 = vperm.xlu0 %61, %v26
    %v63 = vpop.permute.xlu0 %62
    %65 = vset.pattern.permute.xlu0 1
    %66 = vperm.xlu0 %65, %v27
    %v67 = vpop.permute.xlu0 %66
    %69 = vset.pattern.permute.xlu0 1
    %70 = vperm.xlu0 %69, %v28
    %v71 = vpop.permute.xlu0 %70
    %v73 = vlaneseq
    %v74 = vshrl.u32 %v73, 7
    %v75 = vsub.s32 1, %v74
    %v76 = vrot.slane %v24, %v75
    %v77 = vmul.f32 %v59, %v76
    %v78 = vmul.f32 %v63, %v76
    %v79 = vmul.f32 %v67, %v76
    %v80 = vmul.f32 %v71, %v76
    %v81 = vadd.f32 %v53, %v77
    %v82 = vadd.f32 %v54, %v78
    %v83 = vadd.f32 %v55, %v79
    %v84 = vadd.f32 %v56, %v80
    %v85 = vld [vmem:[%s4] sm:$0xff]
    %v86 = vld [vmem:[%s4 + $0x8] sm:$0xff]
    %v87 = vld [vmem:[%s4 + $0x10] sm:$0xff]
    %v88 = vld [vmem:[%s4 + $0x18] sm:$0xff]
    %90 = vset.pattern.permute.xlu0 0
    %91 = vperm.xlu0 %90, %v85
    %v92 = vpop.permute.xlu0 %91
    %95 = vset.pattern.permute.xlu0 0
    %96 = vperm.xlu0 %95, %v86
    %v97 = vpop.permute.xlu0 %96
    %100 = vset.pattern.permute.xlu0 0
    %101 = vperm.xlu0 %100, %v87
    %v102 = vpop.permute.xlu0 %101
    %105 = vset.pattern.permute.xlu0 0
    %106 = vperm.xlu0 %105, %v88
    %v107 = vpop.permute.xlu0 %106
    %v109 = vadd.f32 %v81, %v92
    %v110 = vadd.f32 %v82, %v97
    %v111 = vadd.f32 %v83, %v102
    %v112 = vadd.f32 %v84, %v107
    %v113 = vtanh.pop %v109
    %v114 = vtanh.pop %v110
    %v115 = vtanh.pop %v111
    %v116 = vtanh.pop %v112
    %v117 = vld [vmem:[%s2] sm:$0xff]
    %v118 = vld [vmem:[%s2 + $0x8] sm:$0xff]
    %v119 = vld [vmem:[%s2 + $0x10] sm:$0xff]
    %v120 = vld [vmem:[%s2 + $0x18] sm:$0xff]
    %s121 = scalar_lea.vmem %s4, 32
    %v122 = vld [vmem:[%s121] sm:$0xff]
    %v123 = vld [vmem:[%s121 + $0x8] sm:$0xff]
    %v124 = vld [vmem:[%s121 + $0x10] sm:$0xff]
    %v125 = vld [vmem:[%s121 + $0x18] sm:$0xff]
    %127 = vset.pattern.permute.xlu0 0
    %128 = vperm.xlu0 %127, %v122
    %v129 = vpop.permute.xlu0 %128
    %132 = vset.pattern.permute.xlu0 0
    %133 = vperm.xlu0 %132, %v123
    %v134 = vpop.permute.xlu0 %133
    %137 = vset.pattern.permute.xlu0 0
    %138 = vperm.xlu0 %137, %v124
    %v139 = vpop.permute.xlu0 %138
    %142 = vset.pattern.permute.xlu0 0
    %143 = vperm.xlu0 %142, %v125
    %v144 = vpop.permute.xlu0 %143
    %vm146 = vcmask 261120
    %v148 = vsel %vm146, %v117, 0
    %v151 = vsel %vm146, %v118, 0
    %v154 = vsel %vm146, %v119, 0
    %v157 = vsel %vm146, %v120, 0
    %159 = vmatprep.subr.mxu0 0.0
    %160 = vmatpush1.msra.mxu0 0.0
    %161 = vmatprep.subr.mxu0 0.0
    %162 = vmatpush1.msra.mxu0 0.0
    %163 = vmatprep.subr.mxu0 0.0
    %164 = vmatpush1.msra.mxu0 0.0
    %165 = vmatprep.subr.mxu0 0.0
    %166 = vmatpush1.msra.mxu0 0.0
    %167 = vmatprep.subr.mxu0 0.0
    %168 = vmatpush1.msra.mxu0 0.0
    %169 = vmatprep.subr.mxu0 0.0
    %170 = vmatpush1.msra.mxu0 0.0
    %171 = vmatprep.subr.mxu0 0.0
    %172 = vmatpush1.msra.mxu0 0.0
    %173 = vmatprep.subr.mxu0 0.0
    %174 = vmatpush1.msra.mxu0 0.0
    %175 = vmatprep.subr.mxu0 0.0
    %176 = vmatpush1.msra.mxu0 0.0
    %177 = vmatprep.subr.mxu0 0.0
    %178 = vmatpush1.msra.mxu0 0.0
    %179 = vmatprep.subr.mxu0 0.0
    %180 = vmatpush1.msra.mxu0 0.0
    %181 = vmatprep.subr.mxu0 0.0
    %182 = vmatpush1.msra.mxu0 0.0
    %183 = vmatprep.subr.mxu0 0.0
    %184 = vmatpush1.msra.mxu0 %v116
    %185 = vmatprep.subr.mxu0 0.0
    %186 = vmatpush1.msra.mxu0 %v115
    %187 = vmatprep.subr.mxu0 0.0
    %188 = vmatpush1.msra.mxu0 %v114
    %189 = vmatprep.subr.mxu0 0.0
    %190 = vmatpush1.msra.mxu0 %v113
    %191 = vmatprep.subr.mxu0 0.0
    %192 = vmatpush2.msra.mxu0 0.0
    %193 = vmatprep.subr.mxu0 0.0
    %194 = vmatpush2.msra.mxu0 0.0
    %195 = vmatprep.subr.mxu0 0.0
    %196 = vmatpush2.msra.mxu0 0.0
    %197 = vmatprep.subr.mxu0 0.0
    %198 = vmatpush2.msra.mxu0 0.0
    %199 = vmatprep.subr.mxu0 0.0
    %200 = vmatpush2.msra.mxu0 0.0
    %201 = vmatprep.subr.mxu0 0.0
    %202 = vmatpush2.msra.mxu0 0.0
    %203 = vmatprep.subr.mxu0 0.0
    %204 = vmatpush2.msra.mxu0 0.0
    %205 = vmatprep.subr.mxu0 0.0
    %206 = vmatpush2.msra.mxu0 0.0
    %207 = vmatprep.subr.mxu0 0.0
    %208 = vmatpush2.msra.mxu0 0.0
    %209 = vmatprep.subr.mxu0 0.0
    %210 = vmatpush2.msra.mxu0 0.0
    %211 = vmatprep.subr.mxu0 0.0
    %212 = vmatpush2.msra.mxu0 0.0
    %213 = vmatprep.subr.mxu0 0.0
    %214 = vmatpush2.msra.mxu0 0.0
    %215 = vmatprep.subr.mxu0 0.0
    %216 = vmatpush2.msra.mxu0 0.0
    %217 = vmatprep.subr.mxu0 0.0
    %218 = vmatpush2.msra.mxu0 0.0
    %219 = vmatprep.subr.mxu0 0.0
    %220 = vmatpush2.msra.mxu0 0.0
    %221 = vmatprep.subr.mxu0 0.0
    %222 = vmatpush2.msra.mxu0 0.0
    %223 = vmatprep.mubr.f32.mxu0 0.0
    %224 = vmatmul.mubr.f32.gmra.mxu0 %v148
    %v225 = vpop.f32.mrf.mxu0
    %v226 = vadd.f32 %v129, %v225
    %v227 = vpop.f32.mrf.mxu0
    %228 = vmatprep.mubr.f32.mxu0 0.0
    %229 = vmatmul.mubr.f32.gmra.mxu0 %v151
    %v230 = vpop.f32.mrf.mxu0
    %v231 = vadd.f32 %v134, %v230
    %v232 = vpop.f32.mrf.mxu0
    %233 = vmatprep.mubr.f32.mxu0 0.0
    %234 = vmatmul.mubr.f32.gmra.mxu0 %v154
    %v235 = vpop.f32.mrf.mxu0
    %v236 = vadd.f32 %v139, %v235
    %v237 = vpop.f32.mrf.mxu0
    %238 = vmatprep.mubr.f32.mxu0 0.0
    %239 = vmatmul.mubr.f32.gmra.mxu0 %v157
    %v240 = vpop.f32.mrf.mxu0
    %v241 = vadd.f32 %v144, %v240
    %v242 = vpop.f32.mrf.mxu0
    %243 = vdwg.mxu0
    %v244 = vtanh.pop %v226
    %v245 = vtanh.pop %v231
    %v246 = vtanh.pop %v236
    %v247 = vtanh.pop %v241
    %v248 = vld [vmem:[%s3] sm:$0xff]
    %v249 = vld [vmem:[%s5] sm:$0xff]
    %251 = vset.pattern.permute.xlu0 0
    %252 = vperm.xlu0 %251, %v249
    %v253 = vpop.permute.xlu0 %252
    %v256 = vsel %vm146, %v248, 0
    %258 = vmatprep.subr.mxu0 0.0
    %259 = vmatpush1.msra.mxu0 0.0
    %260 = vmatprep.subr.mxu0 0.0
    %261 = vmatpush1.msra.mxu0 0.0
    %262 = vmatprep.subr.mxu0 0.0
    %263 = vmatpush1.msra.mxu0 0.0
    %264 = vmatprep.subr.mxu0 0.0
    %265 = vmatpush1.msra.mxu0 0.0
    %266 = vmatprep.subr.mxu0 0.0
    %267 = vmatpush1.msra.mxu0 0.0
    %268 = vmatprep.subr.mxu0 0.0
    %269 = vmatpush1.msra.mxu0 0.0
    %270 = vmatprep.subr.mxu0 0.0
    %271 = vmatpush1.msra.mxu0 0.0
    %272 = vmatprep.subr.mxu0 0.0
    %273 = vmatpush1.msra.mxu0 0.0
    %274 = vmatprep.subr.mxu0 0.0
    %275 = vmatpush1.msra.mxu0 0.0
    %276 = vmatprep.subr.mxu0 0.0
    %277 = vmatpush1.msra.mxu0 0.0
    %278 = vmatprep.subr.mxu0 0.0
    %279 = vmatpush1.msra.mxu0 0.0
    %280 = vmatprep.subr.mxu0 0.0
    %281 = vmatpush1.msra.mxu0 0.0
    %282 = vmatprep.subr.mxu0 0.0
    %283 = vmatpush1.msra.mxu0 %v247
    %284 = vmatprep.subr.mxu0 0.0
    %285 = vmatpush1.msra.mxu0 %v246
    %286 = vmatprep.subr.mxu0 0.0
    %287 = vmatpush1.msra.mxu0 %v245
    %288 = vmatprep.subr.mxu0 0.0
    %289 = vmatpush1.msra.mxu0 %v244
    %290 = vmatprep.subr.mxu0 0.0
    %291 = vmatpush2.msra.mxu0 0.0
    %292 = vmatprep.subr.mxu0 0.0
    %293 = vmatpush2.msra.mxu0 0.0
    %294 = vmatprep.subr.mxu0 0.0
    %295 = vmatpush2.msra.mxu0 0.0
    %296 = vmatprep.subr.mxu0 0.0
    %297 = vmatpush2.msra.mxu0 0.0
    %298 = vmatprep.subr.mxu0 0.0
    %299 = vmatpush2.msra.mxu0 0.0
    %300 = vmatprep.subr.mxu0 0.0
    %301 = vmatpush2.msra.mxu0 0.0
    %302 = vmatprep.subr.mxu0 0.0
    %303 = vmatpush2.msra.mxu0 0.0
    %304 = vmatprep.subr.mxu0 0.0
    %305 = vmatpush2.msra.mxu0 0.0
    %306 = vmatprep.subr.mxu0 0.0
    %307 = vmatpush2.msra.mxu0 0.0
    %308 = vmatprep.subr.mxu0 0.0
    %309 = vmatpush2.msra.mxu0 0.0
    %310 = vmatprep.subr.mxu0 0.0
    %311 = vmatpush2.msra.mxu0 0.0
    %312 = vmatprep.subr.mxu0 0.0
    %313 = vmatpush2.msra.mxu0 0.0
    %314 = vmatprep.subr.mxu0 0.0
    %315 = vmatpush2.msra.mxu0 0.0
    %316 = vmatprep.subr.mxu0 0.0
    %317 = vmatpush2.msra.mxu0 0.0
    %318 = vmatprep.subr.mxu0 0.0
    %319 = vmatpush2.msra.mxu0 0.0
    %320 = vmatprep.subr.mxu0 0.0
    %321 = vmatpush2.msra.mxu0 0.0
    %322 = vmatprep.mubr.f32.mxu0 0.0
    %323 = vmatmul.mubr.f32.gmra.mxu0 %v256
    %v324 = vpop.f32.mrf.mxu0
    %v325 = vadd.f32 %v253, %v324
    %v326 = vpop.f32.mrf.mxu0
    %327 = vdwg.mxu0
    %328 = vst [vmem:[#allocation2] sm:$0xff] %v325
    // Predicated region
    $region26: #{tpu_custom_call.1} parent=1 // pred_check
      _
    $region27: #{tpu_custom_call.1} parent=1 // pred_check_branch
      %330 = sbr.rel (0) target = $region29
    $region28: #{tpu_custom_call.1} parent=1 // pred_region
      %s332 = ssub.s32 128, 128
      %333 = vsyncadd [#allocation3], %s332
      %s335 = sshll.u32 [#allocation2], 4
      %s336 = int_to_ptr.vmem [resolvable:$true] %s335
      %338 = dma.vmem_to_hbm [thread:$0]  %s336, 128, %s6, [#allocation3]
    $region29: #{tpu_custom_call.1} parent=1 // pred_fallthru
      _
    // Predicated region
    $region30: #{tpu_custom_call.1} parent=1 // pred_check
      _
    $region31: #{tpu_custom_call.1} parent=1 // pred_check_branch
      %340 = sbr.rel (0) target = $region33
    $region32: #{tpu_custom_call.1} parent=1 // pred_region
      %341 = dma.done [#allocation3], 128
    $region33: #{tpu_custom_call.1} parent=1 // pred_fallthru
      _
    %342 = vsyncpa [#allocation3], 1

</llo_original>
